<compile_context>
chip_gen: v7x
topology: tpu7x:2x2x1
jax: 0.10.0
libtpu: 0.0.40
codegen_flags: <defaults>
</compile_context>

<pallas_src>
import functools

import jax
import jax.numpy as jnp
from jax.experimental import pallas as pl
from jax.experimental.pallas import tpu as pltpu

_EPS = 1e-5  # nn.LayerNorm default


# ----------------------------- helpers -------------------------------------- #
def _vmem_limit_bytes():
    """Scoped-VMEM request sized per TPU generation (leave Mosaic headroom)."""
    try:
        cap = pltpu.get_tpu_info().vmem_capacity_bytes
    except Exception:  # pragma: no cover - conservative fallback
        cap = 64 << 20
    # v7x (64 MiB physical) -> 48 MiB; v5e/v6e (128 MiB physical) -> 64 MiB.
    return max(32 << 20, min(64 << 20, cap - (16 << 20)))


def _pick_block_rows(n_rows, bytes_per_row, target_block_bytes):
    """Largest row-block (multiple of 8) whose bytes stay under the target."""
    if n_rows * bytes_per_row <= target_block_bytes:
        return n_rows  # full extent: always a legal block shape
    max_rows = max(8, target_block_bytes // max(1, bytes_per_row))
    blk = max(8, (max_rows // 8) * 8)
    return min(blk, n_rows)


# ----------------------------- kernels -------------------------------------- #
def _layernorm_kernel(x_ref, g_ref, b_ref, o_ref):
    # x_ref: (blk, H) block; g_ref / b_ref: (1, H) float32 (resident, revisited).
    x = x_ref[...].astype(jnp.float32)
    h = x.shape[-1]
    inv_h = 1.0 / h
    # Single pass: two independent lane reductions, then one elementwise sweep.
    s1 = jnp.sum(x, axis=-1, keepdims=True)
    s2 = jnp.sum(x * x, axis=-1, keepdims=True)
    mean = s1 * inv_h
    var = jnp.maximum(s2 * inv_h - mean * mean, 0.0)
    inv_std = jax.lax.rsqrt(var + _EPS)
    o_ref[...] = ((x - mean) * inv_std * g_ref[...] + b_ref[...]).astype(o_ref.dtype)


def _residual_add_kernel(x_ref, y_ref, o_ref):
    o_ref[...] = x_ref[...] + y_ref[...]


# ----------------------------- wrappers ------------------------------------- #
def pallas_layernorm(x, gamma, beta):
    """LayerNorm over the last axis; rows flattened to (B*S, H) and row-tiled."""
    orig_shape = x.shape
    H = orig_shape[-1]
    R = x.size // H
    x2 = x.reshape(R, H)
    g = gamma.reshape(1, H).astype(jnp.float32)   # params stay f32 end-to-end
    b = beta.reshape(1, H).astype(jnp.float32)

    # ~8 MiB per block (sized on the in-kernel f32 working set): double-buffered
    # in+out ~= 32 MiB, under the 48 MiB scoped cap on v7x and trivial on v5e/v6e.
    blk = _pick_block_rows(R, H * 4, target_block_bytes=8 << 20)
    grid = (pl.cdiv(R, blk),)

    itemsize = x.dtype.itemsize
    bytes_accessed = 2 * R * H * itemsize + 2 * H * 4  # read x + write out + params

    # TODO(synk): when H % 128 != 0 the loads/stores are lane-masked; a packed
    # (blk, k*H) layout with a segmented reduce would recover full lane BW.
    out = pl.pallas_call(
        _layernorm_kernel,
        out_shape=jax.ShapeDtypeStruct((R, H), x.dtype),
        grid=grid,
        in_specs=[
            pl.BlockSpec((blk, H), lambda i: (i, 0)),
            pl.BlockSpec((1, H), lambda i: (0, 0)),
            pl.BlockSpec((1, H), lambda i: (0, 0)),
        ],
        out_specs=pl.BlockSpec((blk, H), lambda i: (i, 0)),
        compiler_params=pltpu.CompilerParams(
            dimension_semantics=("parallel",),
            vmem_limit_bytes=_vmem_limit_bytes(),
        ),
        cost_estimate=pl.CostEstimate(
            flops=7 * R * H, transcendentals=R, bytes_accessed=bytes_accessed
        ),
    )(x2, g, b)
    return out.reshape(orig_shape)


def pallas_residual_add(x, y):
    """Elementwise x + y (opt-in path; prefer the fused jnp add under jit)."""
    orig_shape = x.shape
    H = orig_shape[-1]
    total = x.size
    itemsize = x.dtype.itemsize

    if H % 128 == 0:
        # Already lane-dense in native layout: no reshape, no relayout risk.
        lanes = H
        rows = total // lanes
    elif total % 128 == 0:
        # Present a lane-dense slab so stores are unmasked vst.
        lanes = 128
        rows = total // lanes
    else:
        lanes = H
        rows = total // lanes
    x2 = x.reshape(rows, lanes)
    y2 = y.reshape(rows, lanes)

    vmem_limit = _vmem_limit_bytes()
    target = (10 << 20) if vmem_limit >= (64 << 20) else (6 << 20)
    blk = _pick_block_rows(rows, lanes * itemsize, target_block_bytes=target)
    grid = (pl.cdiv(rows, blk),)

    out = pl.pallas_call(
        _residual_add_kernel,
        out_shape=jax.ShapeDtypeStruct((rows, lanes), x.dtype),
        grid=grid,
        in_specs=[
            pl.BlockSpec((blk, lanes), lambda i: (i, 0)),
            pl.BlockSpec((blk, lanes), lambda i: (i, 0)),
        ],
        out_specs=pl.BlockSpec((blk, lanes), lambda i: (i, 0)),
        compiler_params=pltpu.CompilerParams(
            dimension_semantics=("parallel",),
            vmem_limit_bytes=vmem_limit,
        ),
        cost_estimate=pl.CostEstimate(
            flops=total, transcendentals=0, bytes_accessed=3 * total * itemsize
        ),
        # x1 (y2) is dead after this op: donate it as the output buffer (only
        # actually saves an allocation when the forward is under jit).
        input_output_aliases={1: 0},
    )(x2, y2)
    return out.reshape(orig_shape)


# ----------------------------- module --------------------------------------- #
@functools.partial(jax.jit, static_argnums=(3, 4))
def _sublayer_forward(x, gamma, beta, sublayer, use_pallas_add):
    x1 = pallas_layernorm(x, gamma, beta)   # Pallas: norm (lane reduction)
    x1 = sublayer(x1)                        # arbitrary callable, plain JAX
    if use_pallas_add:
        return pallas_residual_add(x, x1)    # opt-in: non-fusible producers
    # Default: plain add inside the same jit -> XLA fuses it into the
    # sublayer's epilogue (no extra HBM round trip of x1).
    return x + x1


class SublayerConnection:
    """Residual connection with a pre-applied LayerNorm (Pallas-backed)."""

    def __init__(self, size, dropout=0.0, key=None, use_pallas_add=False):
        # nn.LayerNorm(size[1:]) -> normalized_shape = size[1:]; here size = (S, H).
        self.normalized_shape = tuple(size[1:])
        (self.hidden,) = self.normalized_shape
        if key is None:
            key = jax.random.PRNGKey(0)
        kg, kb = jax.random.split(key)
        # PyTorch default is ones/zeros; perturb slightly so the affine term is
        # actually exercised.  Kept float32 end-to-end.
        self.gamma = jnp.ones((self.hidden,), jnp.float32) + 0.02 * jax.random.normal(
            kg, (self.hidden,), jnp.float32
        )
        self.beta = 0.02 * jax.random.normal(kb, (self.hidden,), jnp.float32)
        # `dropout` is unused in the reference forward pass.
        self.dropout = dropout
        self.use_pallas_add = use_pallas_add

    def __call__(self, x, sublayer):
        return _sublayer_forward(x, self.gamma, self.beta, sublayer,
                                 self.use_pallas_add)


# ----------------------------- demo / check --------------------------------- #
def _reference_forward(x, gamma, beta, sublayer):
    mean = jnp.mean(x, axis=-1, keepdims=True)
    var = jnp.mean((x - mean) ** 2, axis=-1, keepdims=True)
    x1 = (x - mean) / jnp.sqrt(var + _EPS) * gamma + beta
    return x + sublayer(x1)


if __name__ == "__main__":
    B, S, H = 2, 8, 32

    key = jax.random.PRNGKey(0)
    kx, kw, kb, kp = jax.random.split(key, 4)
    x = jax.random.normal(kx, (B, S, H), dtype=jnp.float32)

    # Example sublayer (the module treats it as an opaque callable): linear + relu.
    W = 0.1 * jax.random.normal(kw, (H, H), dtype=jnp.float32)
    bias = 0.1 * jax.random.normal(kb, (H,), dtype=jnp.float32)
    sublayer = lambda t: jnp.maximum(jnp.einsum("bsh,hk->bsk", t, W) + bias, 0.0)

    ref = None

    # Default path: LN in Pallas, residual add fused by XLA inside the jit.
    module = SublayerConnection(size=(S, H), dropout=0.1, key=kp)
    out = jax.block_until_ready(module(x, sublayer))
    ref = _reference_forward(x, module.gamma, module.beta, sublayer)
    assert out.shape == (B, S, H) and out.dtype == x.dtype
    assert jnp.allclose(out, ref, atol=1e-5, rtol=1e-5)

    # Opt-in path: explicit Pallas residual add (for non-fusible producers).
    module_pa = SublayerConnection(size=(S, H), dropout=0.1, key=kp,
                                   use_pallas_add=True)
    out_pa = jax.block_until_ready(module_pa(x, sublayer))
    assert jnp.allclose(out_pa, ref, atol=1e-5, rtol=1e-5)

    print("KERNEL_OK")
</pallas_src>

<mosaic_0001>
module attributes {stable_mosaic.version = 11 : i64} {
  func.func @_layernorm_kernel(%arg0: i32, %arg1: memref<16x32xf32, #tpu.memory_space<vmem>>, %arg2: memref<1x32xf32, #tpu.memory_space<vmem>>, %arg3: memref<1x32xf32, #tpu.memory_space<vmem>>, %arg4: memref<16x32xf32, #tpu.memory_space<vmem>>) attributes {dimension_semantics = [#tpu.dimension_semantics<parallel>], iteration_bounds = array<i64: 1>, scalar_prefetch = 0 : i64, scratch_operands = 0 : i64, tpu.core_type = #tpu.core_type<tc>, window_params = [{transform_indices = @transform_0, window_bounds = array<i64: 16, 32>}, {pipeline_mode = #tpu.pipeline_mode<synchronous>, transform_indices = @transform_1, window_bounds = array<i64: 1, 32>}, {pipeline_mode = #tpu.pipeline_mode<synchronous>, transform_indices = @transform_2, window_bounds = array<i64: 1, 32>}, {transform_indices = @transform_3, window_bounds = array<i64: 16, 32>}]} {
    %c0 = arith.constant 0 : index
    %c0_0 = arith.constant 0 : index
    %0 = vector.load %arg1[%c0, %c0_0] : memref<16x32xf32, #tpu.memory_space<vmem>>, vector<16x32xf32>
    %cst = arith.constant dense<0.000000e+00> : vector<16xf32>
    %1 = vector.multi_reduction <add>, %0, %cst [1] : vector<16x32xf32> to vector<16xf32>
    %2 = vector.shape_cast %1 : vector<16xf32> to vector<16x1xf32>
    %3 = arith.mulf %0, %0 : vector<16x32xf32>
    %cst_1 = arith.constant dense<0.000000e+00> : vector<16xf32>
    %4 = vector.multi_reduction <add>, %3, %cst_1 [1] : vector<16x32xf32> to vector<16xf32>
    %5 = vector.shape_cast %4 : vector<16xf32> to vector<16x1xf32>
    %cst_2 = arith.constant 3.125000e-02 : f32
    %6 = vector.broadcast %cst_2 : f32 to vector<16x1xf32>
    %7 = arith.mulf %2, %6 : vector<16x1xf32>
    %cst_3 = arith.constant 3.125000e-02 : f32
    %8 = vector.broadcast %cst_3 : f32 to vector<16x1xf32>
    %9 = arith.mulf %5, %8 : vector<16x1xf32>
    %10 = arith.mulf %7, %7 : vector<16x1xf32>
    %11 = arith.subf %9, %10 : vector<16x1xf32>
    %cst_4 = arith.constant 0.000000e+00 : f32
    %12 = vector.broadcast %cst_4 : f32 to vector<16x1xf32>
    %13 = arith.maximumf %11, %12 : vector<16x1xf32>
    %cst_5 = arith.constant 9.99999974E-6 : f32
    %14 = vector.broadcast %cst_5 : f32 to vector<16x1xf32>
    %15 = arith.addf %13, %14 : vector<16x1xf32>
    %16 = math.rsqrt %15 : vector<16x1xf32>
    %17 = vector.broadcast %7 : vector<16x1xf32> to vector<16x32xf32>
    %18 = arith.subf %0, %17 : vector<16x32xf32>
    %19 = vector.broadcast %16 : vector<16x1xf32> to vector<16x32xf32>
    %20 = arith.mulf %18, %19 : vector<16x32xf32>
    %c0_6 = arith.constant 0 : index
    %c0_7 = arith.constant 0 : index
    %21 = vector.load %arg2[%c0_6, %c0_7] : memref<1x32xf32, #tpu.memory_space<vmem>>, vector<1x32xf32>
    %22 = vector.broadcast %21 : vector<1x32xf32> to vector<16x32xf32>
    %23 = arith.mulf %20, %22 : vector<16x32xf32>
    %c0_8 = arith.constant 0 : index
    %c0_9 = arith.constant 0 : index
    %24 = vector.load %arg3[%c0_8, %c0_9] : memref<1x32xf32, #tpu.memory_space<vmem>>, vector<1x32xf32>
    %25 = vector.broadcast %24 : vector<1x32xf32> to vector<16x32xf32>
    %26 = arith.addf %23, %25 : vector<16x32xf32>
    %c0_10 = arith.constant 0 : index
    %c0_11 = arith.constant 0 : index
    %27 = vector.load %arg4[%c0_10, %c0_11] : memref<16x32xf32, #tpu.memory_space<vmem>>, vector<16x32xf32>
    tpu.vector_store %arg4[%c0_10, %c0_11], %26 {strides = array<i32>} : memref<16x32xf32, #tpu.memory_space<vmem>>, vector<16x32xf32>,
    return
  }
  func.func @transform_0(%arg0: i32) -> (i32, i32) {
    %c0_i32 = arith.constant 0 : i32
    %c0_i32_0 = arith.constant 0 : i32
    return %arg0, %c0_i32 : i32, i32
  }
  func.func @transform_1(%arg0: i32) -> (i32, i32) {
    %c0_i32 = arith.constant 0 : i32
    %c0_i32_0 = arith.constant 0 : i32
    %c0_i32_1 = arith.constant 0 : i32
    return %c0_i32, %c0_i32_0 : i32, i32
  }
  func.func @transform_2(%arg0: i32) -> (i32, i32) {
    %c0_i32 = arith.constant 0 : i32
    %c0_i32_0 = arith.constant 0 : i32
    %c0_i32_1 = arith.constant 0 : i32
    return %c0_i32, %c0_i32_0 : i32, i32
  }
  func.func @transform_3(%arg0: i32) -> (i32, i32) {
    %c0_i32 = arith.constant 0 : i32
    %c0_i32_0 = arith.constant 0 : i32
    return %arg0, %c0_i32 : i32, i32
  }
}

</mosaic_0001>

<llo_original>
// kernel: _sublayer_forward.1
$region0: #{_sublayer_forward.1}
  #allocation0 [shape = 'u32[]', space=smem, size = 0x4, offset = 0x4, fixed_abs, tag = 'smem constant byte address 0x4 - core index']
  #allocation1 [shape = 'u32[144,128]{1,0:T(1,128)}', space=vmem, size = 0x12000, scoped, tag = 'internal scratch']
  %s0 = inlined_call_operand.vmem [shape: f32[16,32], index: 0, kind: input, shape index: {}]
  %s1 = inlined_call_operand.vmem [shape: f32[1,32], index: 1, kind: input, shape index: {}]
  %s2 = inlined_call_operand.vmem [shape: f32[1,32], index: 2, kind: input, shape index: {}]
  %s3 = inlined_call_operand.vmem [shape: f32[16,32], index: 3, kind: output, shape index: {}]
  %s4 = sld [smem:[#allocation0]]
  $region22: #{_sublayer_forward.1} parent=0
    _
  %s6 = ssub.s32 1, %s4
  %s7 = scalar_select 0, %s6, %s4
  // Predicated region
  $region2: #{_sublayer_forward.1} parent=0 // pred_check
    _
  $region3: #{_sublayer_forward.1} parent=0 // pred_check_branch
    %9 = sbr.rel (0) target = $region5
  $region4: #{_sublayer_forward.1} parent=0 // pred_region
    _
  $region5: #{_sublayer_forward.1} parent=0 // pred_fallthru
    _
  // Predicated region
  $region6: #{_sublayer_forward.1} parent=0 // pred_check
    _
  $region7: #{_sublayer_forward.1} parent=0 // pred_check_branch
    %11 = sbr.rel (0) target = $region9
  $region8: #{_sublayer_forward.1} parent=0 // pred_region
    _
  $region9: #{_sublayer_forward.1} parent=0 // pred_fallthru
    _
  // Predicated region
  $region10: #{_sublayer_forward.1} parent=0 // pred_check
    _
  $region11: #{_sublayer_forward.1} parent=0 // pred_check_branch
    %13 = sbr.rel (0) target = $region13
  $region12: #{_sublayer_forward.1} parent=0 // pred_region
    _
  $region13: #{_sublayer_forward.1} parent=0 // pred_fallthru
    _
  %v14 = vld [vmem:[%s0] sm:$0xff]
  %v15 = vld [vmem:[%s0 + $0x8] sm:$0xff]
  %vm16 = vcmask 261120
  %v17 = vsel %vm16, %v14, 0.0
  %18 = vadd.xlane.f32.xlu0 %v17
  %v19 = vpop.xlane.xlu0 %18
  %v20 = vsel %vm16, %v15, 0.0
  %21 = vadd.xlane.f32.xlu0 %v20
  %v22 = vpop.xlane.xlu0 %21
  %v23 = vmul.f32 %v14, %v14
  %v24 = vmul.f32 %v15, %v15
  %v25 = vsel %vm16, %v23, 0.0
  %26 = vadd.xlane.f32.xlu0 %v25
  %v27 = vpop.xlane.xlu0 %26
  %v28 = vsel %vm16, %v24, 0.0
  %29 = vadd.xlane.f32.xlu0 %v28
  %v30 = vpop.xlane.xlu0 %29
  %v31 = vmul.f32 %v19, 0.03125
  %v32 = vmul.f32 %v22, 0.03125
  %v33 = vmul.f32 %v27, 0.03125
  %v34 = vmul.f32 %v30, 0.03125
  %v35 = vmul.f32 %v31, %v31
  %v36 = vmul.f32 %v32, %v32
  %v37 = vsub.f32 %v33, %v35
  %v38 = vsub.f32 %v34, %v36
  %v39 = vmax.f32 %v37, 0.0
  %v40 = vmax.f32 %v38, 0.0
  %v41 = vadd.f32 %v39, 1e-05
  %v42 = vadd.f32 %v40, 1e-05
  %v43 = vrsqrt.pop %v41
  %v44 = vrsqrt.pop %v42
  %v45 = vsub.f32 %v14, %v31
  %v46 = vsub.f32 %v15, %v32
  %v47 = vmul.f32 %v45, %v43
  %v48 = vmul.f32 %v46, %v44
  %v49 = vld [vmem:[%s1] sm:$0x1]
  %v51 = vlaneseq
  %v52 = vshrl.u32 %v51, 7
  %v53 = vsub.s32 0, %v52
  %v54 = vrot.slane %v49, %v53
  %v56 = vmul.f32 %v47, %v54
  %v57 = vmul.f32 %v48, %v54
  %v58 = vld [vmem:[%s2] sm:$0x1]
  %v60 = vlaneseq
  %v61 = vshrl.u32 %v60, 7
  %v62 = vsub.s32 0, %v61
  %v63 = vrot.slane %v58, %v62
  %v65 = vadd.f32 %v56, %v63
  %v66 = vadd.f32 %v57, %v63
  %67 = vst.msk [vmem:[%s3] sm:$0xff] %vm16, %v65
  %68 = vst.msk [vmem:[%s3 + $0x8] sm:$0xff] %vm16, %v66
  // Predicated region
  $region14: #{_sublayer_forward.1} parent=0 // pred_check
    _
  $region15: #{_sublayer_forward.1} parent=0 // pred_check_branch
    %70 = sbr.rel (0) target = $region17
  $region16: #{_sublayer_forward.1} parent=0 // pred_region
    _
  $region17: #{_sublayer_forward.1} parent=0 // pred_fallthru
    _
  // Predicated region
  $region18: #{_sublayer_forward.1} parent=0 // pred_check
    _
  $region19: #{_sublayer_forward.1} parent=0 // pred_check_branch
    %72 = sbr.rel (0) target = $region21
  $region20: #{_sublayer_forward.1} parent=0 // pred_region
    _
  $region21: #{_sublayer_forward.1} parent=0 // pred_fallthru
    _

</llo_original>
